<compile_context>
chip_gen: v7x
topology: tpu7x:2x2x1
jax: 0.10.0
libtpu: 0.0.40
codegen_flags: <defaults>
</compile_context>

<pallas_src>
import functools

import jax
import jax.numpy as jnp
from jax import lax
from jax.experimental import pallas as pl
from jax.experimental.pallas import tpu as pltpu


def _focal_loss_kernel(x_ref, y_ref, alpha_ref, out_ref, acc_ref, *,
                       gamma, size_average, use_alpha, n_total, block_n):
    pid = pl.program_id(0)

    @pl.when(pid == 0)
    def _():
        acc_ref[...] = jnp.zeros_like(acc_ref)

    x = x_ref[...].astype(jnp.float32)                     # (C, bn)
    y = y_ref[...]                                         # (1, bn) int32
    c, bn = x.shape

    # Validity mask for the (possibly padded) last tile: out-of-bounds lanes
    # read unspecified values and must not contribute to the sum.
    lane = lax.broadcasted_iota(jnp.int32, (1, bn), 1)     # (1, bn)
    valid = (pid * block_n + lane) < n_total               # (1, bn) bool

    # One-hot over the class (sublane) axis; gather via masked sublane reduce.
    row = lax.broadcasted_iota(jnp.int32, (c, bn), 0)      # (C, bn)
    onehot = row == y                                      # broadcast (1,bn)->(C,bn)

    # Gather the selected probability first, THEN take log of the (1, bn)
    # result: only N logs total, no exp, no full (C, N) log.
    pt = jnp.sum(jnp.where(onehot, x, 0.0), axis=0, keepdims=True)   # (1, bn)
    pt = jnp.where(valid, pt, 1.0)                         # padded lanes -> log = 0
    log_pt = jnp.log(pt)                                   # (1, bn)

    if use_alpha:
        alpha = alpha_ref[...].astype(jnp.float32)         # (C, 1), implicit bcast
        alpha_t = jnp.sum(jnp.where(onehot, alpha, 0.0), axis=0, keepdims=True)
        log_pt = log_pt * alpha_t

    one_minus_pt = 1.0 - pt
    g = float(gamma)
    if g == 0.0:
        focal = jnp.ones_like(pt)
    elif g.is_integer() and 0.0 < g <= 8.0:
        # Integer power -> repeated VPU multiplies (keeps the EUP free).
        focal = one_minus_pt
        for _ in range(int(g) - 1):
            focal = focal * one_minus_pt
    else:
        focal = one_minus_pt ** g

    loss = jnp.where(valid, -focal * log_pt, 0.0)          # (1, bn)
    acc_ref[...] += jnp.sum(loss, axis=1, keepdims=True)   # (1, 1)

    @pl.when(pid == pl.num_programs(0) - 1)
    def _():
        total = acc_ref[...]
        if size_average:
            total = total / jnp.float32(n_total)
        out_ref[...] = total


def focal_loss(x, y, *, gamma=0.0, alpha=None, size_average=True, block_n=4096):
    """Pallas TPU implementation of FocalLoss.forward.

    x: (N, C) probabilities (any float dtype), y: (N,) integer class indices.
    """
    assert x.ndim == 2, "x dimension has to be (batch size, C)"
    n, c = x.shape

    # Deterministic alpha setup, mirroring the PyTorch __init__.
    if isinstance(alpha, (float, int)) and not isinstance(alpha, bool):
        alpha_arr = jnp.array([alpha, 1.0 - alpha], dtype=jnp.float32)
    elif isinstance(alpha, (list, tuple)):
        alpha_arr = jnp.array(alpha, dtype=jnp.float32)
    elif alpha is None:
        alpha_arr = None
    else:
        alpha_arr = jnp.asarray(alpha, dtype=jnp.float32)

    use_alpha = alpha_arr is not None
    if use_alpha:
        assert alpha_arr.shape[0] == c, (
            f"alpha has {alpha_arr.shape[0]} entries but x has {c} classes")
    else:
        alpha_arr = jnp.ones((c,), dtype=jnp.float32)      # dummy, unused
    alpha_col = alpha_arr.reshape(c, 1).astype(jnp.float32)

    # Lane-dense layout: classes on the sublane axis, batch on the lane axis.
    x_t = x.T                                              # (C, N), native dtype
    y_row = y.reshape(1, n).astype(jnp.int32)              # (1, N)

    # Tile the batch (lane) axis. Tiles must be a multiple of 128 lanes unless
    # they span the whole axis. Tiles are tiny (block_n*C*4 bytes), so the
    # double-buffered footprint stays far below even v5e's 16 MiB scoped VMEM.
    if n <= block_n:
        bn = n
    else:
        bn = max(128, (block_n // 128) * 128)
    grid = (pl.cdiv(n, bn),)

    kernel = functools.partial(
        _focal_loss_kernel,
        gamma=float(gamma),
        size_average=bool(size_average),
        use_alpha=use_alpha,
        n_total=n,
        block_n=bn,
    )

    out = pl.pallas_call(
        kernel,
        out_shape=jax.ShapeDtypeStruct((1, 1), jnp.float32),
        grid_spec=pltpu.PrefetchScalarGridSpec(
            num_scalar_prefetch=0,
            grid=grid,
            in_specs=[
                pl.BlockSpec((c, bn), lambda i: (0, i)),   # x  (C, N) tiles
                pl.BlockSpec((1, bn), lambda i: (0, i)),   # y  (1, N) tiles
                pl.BlockSpec((c, 1), lambda i: (0, 0)),    # alpha, resident
            ],
            out_specs=pl.BlockSpec((1, 1), lambda i: (0, 0)),
            scratch_shapes=[pltpu.VMEM((1, 1), jnp.float32)],
        ),
        compiler_params=pltpu.CompilerParams(
            dimension_semantics=("arbitrary",)),           # reduction axis
        # TODO(synk): on v7x, split the reduction across both TensorCores via a
        # "parallel" axis emitting per-block partials reduced in JAX.
    )(x_t, y_row, alpha_col)

    return out[0, 0]


def _focal_loss_ref(x, y, *, gamma=0.0, alpha=None, size_average=True):
    """Plain-JAX reference matching the PyTorch forward exactly."""
    y = y.reshape(-1).astype(jnp.int32)
    log_pt = jnp.log(x)[jnp.arange(x.shape[0]), y]
    pt = jnp.exp(log_pt)
    if alpha is not None:
        if isinstance(alpha, (float, int)) and not isinstance(alpha, bool):
            alpha_arr = jnp.array([alpha, 1.0 - alpha], dtype=x.dtype)
        else:
            alpha_arr = jnp.asarray(alpha, dtype=x.dtype)
        log_pt = log_pt * alpha_arr[y]
    loss = -1.0 * (1.0 - pt) ** gamma * log_pt
    return jnp.mean(loss) if size_average else jnp.sum(loss)


if __name__ == "__main__":
    # Small shape implied by the module docstring: (batch size, 2).
    key = jax.random.PRNGKey(0)
    kx, ky = jax.random.split(key)
    N, C = 8, 2
    logits = jax.random.normal(kx, (N, C), dtype=jnp.float32)
    x = jax.nn.softmax(logits, axis=-1)
    y = jax.random.randint(ky, (N,), 0, C, dtype=jnp.int32)

    out = focal_loss(x, y, gamma=2.0, alpha=0.25, size_average=True)
    out = jax.block_until_ready(out)
    ref = _focal_loss_ref(x, y, gamma=2.0, alpha=0.25, size_average=True)
    assert jnp.allclose(out, ref, rtol=1e-5, atol=1e-6), (out, ref)

    # Multi-tile grid path (N divisible by the tile): exercises the accumulator.
    N2 = 384
    k2x, k2y = jax.random.split(jax.random.PRNGKey(1))
    x2 = jax.nn.softmax(jax.random.normal(k2x, (N2, C), jnp.float32), axis=-1)
    y2 = jax.random.randint(k2y, (N2,), 0, C, dtype=jnp.int32)
    out2 = jax.block_until_ready(
        focal_loss(x2, y2, gamma=2.0, alpha=0.25, size_average=True, block_n=128))
    ref2 = _focal_loss_ref(x2, y2, gamma=2.0, alpha=0.25, size_average=True)
    assert jnp.allclose(out2, ref2, rtol=1e-5, atol=1e-5), (out2, ref2)

    # Ragged last tile (in-kernel masking), sum reduction, no alpha, gamma=0.
    N3 = 300
    k3x, k3y = jax.random.split(jax.random.PRNGKey(2))
    x3 = jax.nn.softmax(jax.random.normal(k3x, (N3, C), jnp.float32), axis=-1)
    y3 = jax.random.randint(k3y, (N3,), 0, C, dtype=jnp.int32)
    out3 = jax.block_until_ready(
        focal_loss(x3, y3, gamma=0.0, alpha=None, size_average=False, block_n=128))
    ref3 = _focal_loss_ref(x3, y3, gamma=0.0, alpha=None, size_average=False)
    assert jnp.allclose(out3, ref3, rtol=1e-5, atol=1e-5), (out3, ref3)

    print("KERNEL_OK")
</pallas_src>

<mosaic_0001>
module attributes {stable_mosaic.version = 11 : i64} {
  func.func @_focal_loss_kernel(%arg0: i32, %arg1: memref<2x8xf32, #tpu.memory_space<vmem>>, %arg2: memref<1x8xi32, #tpu.memory_space<vmem>>, %arg3: memref<2x1xf32, #tpu.memory_space<vmem>>, %arg4: memref<1x1xf32, #tpu.memory_space<vmem>>, %arg5: memref<1x1xf32, #tpu.memory_space<vmem>>) attributes {dimension_semantics = [#tpu.dimension_semantics<arbitrary>], iteration_bounds = array<i64: 1>, scalar_prefetch = 0 : i64, scratch_operands = 1 : i64, tpu.core_type = #tpu.core_type<tc>, window_params = [{transform_indices = @transform_0, window_bounds = array<i64: 2, 8>}, {transform_indices = @transform_1, window_bounds = array<i64: 1, 8>}, {pipeline_mode = #tpu.pipeline_mode<synchronous>, transform_indices = @transform_2, window_bounds = array<i64: 2, 1>}, {pipeline_mode = #tpu.pipeline_mode<synchronous>, transform_indices = @transform_3, window_bounds = array<i64: 1, 1>}]} {
    %c0_i32 = arith.constant 0 : i32
    %0 = arith.cmpi eq, %arg0, %c0_i32 : i32
    %1 = arith.extui %0 : i1 to i32
    %c0_i32_0 = arith.constant 0 : i32
    %2 = arith.cmpi ne, %1, %c0_i32_0 : i32
    scf.if %2 {
      %cst_21 = arith.constant 0.000000e+00 : f32
      %45 = vector.broadcast %cst_21 : f32 to vector<1x1xf32>
      %c0_22 = arith.constant 0 : index
      %c0_23 = arith.constant 0 : index
      %46 = vector.load %arg5[%c0_22, %c0_23] : memref<1x1xf32, #tpu.memory_space<vmem>>, vector<1x1xf32>
      tpu.vector_store %arg5[%c0_22, %c0_23], %45 {strides = array<i32>} : memref<1x1xf32, #tpu.memory_space<vmem>>, vector<1x1xf32>,
    } else {
    }
    %c0 = arith.constant 0 : index
    %c0_1 = arith.constant 0 : index
    %3 = vector.load %arg1[%c0, %c0_1] : memref<2x8xf32, #tpu.memory_space<vmem>>, vector<2x8xf32>
    %c0_2 = arith.constant 0 : index
    %c0_3 = arith.constant 0 : index
    %4 = vector.load %arg2[%c0_2, %c0_3] : memref<1x8xi32, #tpu.memory_space<vmem>>, vector<1x8xi32>
    %5 = tpu.iota {dimensions = array<i32: 1>} : vector<1x8xi32>
    %c8_i32 = arith.constant 8 : i32
    %6 = arith.muli %arg0, %c8_i32 : i32
    %7 = vector.broadcast %6 : i32 to vector<1x8xi32>
    %8 = arith.addi %7, %5 : vector<1x8xi32>
    %c8_i32_4 = arith.constant 8 : i32
    %9 = vector.broadcast %c8_i32_4 : i32 to vector<1x8xi32>
    %10 = arith.cmpi slt, %8, %9 : vector<1x8xi32>
    %11 = tpu.iota {dimensions = array<i32: 0>} : vector<2x8xi32>
    %12 = vector.broadcast %4 : vector<1x8xi32> to vector<2x8xi32>
    %13 = arith.cmpi eq, %11, %12 : vector<2x8xi32>
    %cst = arith.constant 0.000000e+00 : f32
    %14 = vector.broadcast %cst : f32 to vector<2x8xf32>
    %15 = arith.select %13, %3, %14 : vector<2x8xi1>, vector<2x8xf32>
    %cst_5 = arith.constant dense<0.000000e+00> : vector<8xf32>
    %16 = vector.multi_reduction <add>, %15, %cst_5 [0] : vector<2x8xf32> to vector<8xf32>
    %17 = vector.shape_cast %16 : vector<8xf32> to vector<1x8xf32>
    %cst_6 = arith.constant 1.000000e+00 : f32
    %18 = vector.broadcast %cst_6 : f32 to vector<1x8xf32>
    %19 = arith.select %10, %17, %18 : vector<1x8xi1>, vector<1x8xf32>
    %20 = math.log %19 : vector<1x8xf32>
    %c0_7 = arith.constant 0 : index
    %c0_8 = arith.constant 0 : index
    %21 = vector.load %arg3[%c0_7, %c0_8] : memref<2x1xf32, #tpu.memory_space<vmem>>, vector<2x1xf32>
    %cst_9 = arith.constant 0.000000e+00 : f32
    %22 = vector.shape_cast %21 : vector<2x1xf32> to vector<2x1xf32>
    %23 = vector.broadcast %22 : vector<2x1xf32> to vector<2x8xf32>
    %24 = vector.broadcast %cst_9 : f32 to vector<2x8xf32>
    %25 = arith.select %13, %23, %24 : vector<2x8xi1>, vector<2x8xf32>
    %cst_10 = arith.constant dense<0.000000e+00> : vector<8xf32>
    %26 = vector.multi_reduction <add>, %25, %cst_10 [0] : vector<2x8xf32> to vector<8xf32>
    %27 = vector.shape_cast %26 : vector<8xf32> to vector<1x8xf32>
    %28 = arith.mulf %20, %27 : vector<1x8xf32>
    %cst_11 = arith.constant 1.000000e+00 : f32
    %29 = vector.broadcast %cst_11 : f32 to vector<1x8xf32>
    %30 = arith.subf %29, %19 : vector<1x8xf32>
    %31 = arith.mulf %30, %30 : vector<1x8xf32>
    %cst_12 = arith.constant 0.000000e+00 : f32
    %32 = vector.broadcast %cst_12 : f32 to vector<1x8xf32>
    %33 = arith.subf %32, %31 : vector<1x8xf32>
    %34 = arith.mulf %33, %28 : vector<1x8xf32>
    %cst_13 = arith.constant 0.000000e+00 : f32
    %35 = vector.broadcast %cst_13 : f32 to vector<1x8xf32>
    %36 = arith.select %10, %34, %35 : vector<1x8xi1>, vector<1x8xf32>
    %c0_14 = arith.constant 0 : index
    %c0_15 = arith.constant 0 : index
    %37 = vector.load %arg5[%c0_14, %c0_15] : memref<1x1xf32, #tpu.memory_space<vmem>>, vector<1x1xf32>
    %cst_16 = arith.constant dense<0.000000e+00> : vector<1xf32>
    %38 = vector.multi_reduction <add>, %36, %cst_16 [1] : vector<1x8xf32> to vector<1xf32>
    %39 = vector.shape_cast %38 : vector<1xf32> to vector<1x1xf32>
    %40 = arith.addf %37, %39 : vector<1x1xf32>
    %c0_17 = arith.constant 0 : index
    %c0_18 = arith.constant 0 : index
    %41 = vector.load %arg5[%c0_17, %c0_18] : memref<1x1xf32, #tpu.memory_space<vmem>>, vector<1x1xf32>
    tpu.vector_store %arg5[%c0_17, %c0_18], %40 {strides = array<i32>} : memref<1x1xf32, #tpu.memory_space<vmem>>, vector<1x1xf32>,
    %c0_i32_19 = arith.constant 0 : i32
    %42 = arith.cmpi eq, %arg0, %c0_i32_19 : i32
    %43 = arith.extui %42 : i1 to i32
    %c0_i32_20 = arith.constant 0 : i32
    %44 = arith.cmpi ne, %43, %c0_i32_20 : i32
    scf.if %44 {
      %c0_21 = arith.constant 0 : index
      %c0_22 = arith.constant 0 : index
      %45 = vector.load %arg5[%c0_21, %c0_22] : memref<1x1xf32, #tpu.memory_space<vmem>>, vector<1x1xf32>
      %cst_23 = arith.constant 8.000000e+00 : f32
      %46 = vector.broadcast %cst_23 : f32 to vector<1x1xf32>
      %47 = arith.divf %45, %46 : vector<1x1xf32>
      %c0_24 = arith.constant 0 : index
      %c0_25 = arith.constant 0 : index
      %48 = vector.load %arg4[%c0_24, %c0_25] : memref<1x1xf32, #tpu.memory_space<vmem>>, vector<1x1xf32>
      tpu.vector_store %arg4[%c0_24, %c0_25], %47 {strides = array<i32>} : memref<1x1xf32, #tpu.memory_space<vmem>>, vector<1x1xf32>,
    } else {
    }
    return
  }
  func.func @transform_0(%arg0: i32) -> (i32, i32) {
    %c0_i32 = arith.constant 0 : i32
    %c0_i32_0 = arith.constant 0 : i32
    return %c0_i32, %arg0 : i32, i32
  }
  func.func @transform_1(%arg0: i32) -> (i32, i32) {
    %c0_i32 = arith.constant 0 : i32
    %c0_i32_0 = arith.constant 0 : i32
    return %c0_i32, %arg0 : i32, i32
  }
  func.func @transform_2(%arg0: i32) -> (i32, i32) {
    %c0_i32 = arith.constant 0 : i32
    %c0_i32_0 = arith.constant 0 : i32
    %c0_i32_1 = arith.constant 0 : i32
    return %c0_i32, %c0_i32_0 : i32, i32
  }
  func.func @transform_3(%arg0: i32) -> (i32, i32) {
    %c0_i32 = arith.constant 0 : i32
    %c0_i32_0 = arith.constant 0 : i32
    %c0_i32_1 = arith.constant 0 : i32
    return %c0_i32, %c0_i32_0 : i32, i32
  }
}

</mosaic_0001>

<llo_original>
// kernel: tpu_custom_call.1
$region0: #{tpu_custom_call.1}
  #allocation0 [shape = 'u32[]', space=smem, size = 0x4, offset = 0x4, fixed_abs, tag = 'smem constant byte address 0x4 - core index']
  #allocation1 [shape = 'u32[144,128]{1,0:T(1,128)}', space=vmem, size = 0x12000, scoped, tag = 'internal scratch']
  #allocation2 [shape = 'f32[1,1]{1,0:T(1,128)}', space=vmem, size = 0x200, scoped, tag = 'scratch operand']
  %s0 = inlined_call_operand.vmem [shape: f32[2,8], index: 0, kind: input, shape index: {}]
  %s1 = inlined_call_operand.vmem [shape: s32[1,8], index: 1, kind: input, shape index: {}]
  %s2 = inlined_call_operand.vmem [shape: f32[2,1], index: 2, kind: input, shape index: {}]
  %s3 = inlined_call_operand.hbm [shape: f32[1,1], index: 3, kind: output, shape index: {}]
  %s4 = sld [smem:[#allocation0]]
  $region30: #{tpu_custom_call.1} parent=0
    _
  %s6 = ssub.s32 1, %s4
  %s7 = scalar_select 0, %s6, %s4
  $region1: #{tpu_custom_call.1} parent=0
    #allocation3 [shape = 'u8[512]{0}', space=vmem, size = 0x400, scoped, tag = 'output window, operand 0, single buffered']
    #allocation4 [shape = 's32[1]{0}', space=sflag, size = 0x4, scoped, tag = 'scoped memory for tpu_custom_call.1']
    %8 = vsyncpa [#allocation4], 0
    // Predicated region
    $region2: #{tpu_custom_call.1} parent=1 // pred_check
      _
    $region3: #{tpu_custom_call.1} parent=1 // pred_check_branch
      %10 = sbr.rel (0) target = $region5
    $region4: #{tpu_custom_call.1} parent=1 // pred_region
      _
    $region5: #{tpu_custom_call.1} parent=1 // pred_fallthru
      _
    // Predicated region
    $region6: #{tpu_custom_call.1} parent=1 // pred_check
      _
    $region7: #{tpu_custom_call.1} parent=1 // pred_check_branch
      %12 = sbr.rel (0) target = $region9
    $region8: #{tpu_custom_call.1} parent=1 // pred_region
      _
    $region9: #{tpu_custom_call.1} parent=1 // pred_fallthru
      _
    // Predicated region
    $region10: #{tpu_custom_call.1} parent=1 // pred_check
      _
    $region11: #{tpu_custom_call.1} parent=1 // pred_check_branch
      %14 = sbr.rel (0) target = $region13
    $region12: #{tpu_custom_call.1} parent=1 // pred_region
      _
    $region13: #{tpu_custom_call.1} parent=1 // pred_fallthru
      _
    %p15 = scmp.eq.s32.totalorder 0, 0
    // Predicated region
    $region14: #{tpu_custom_call.1} parent=1 // pred_check
      %p16 = pneg %p15
    $region15: #{tpu_custom_call.1} parent=1 // pred_check_branch
      %18 = sbr.rel (%p16) target = $region17
    $region16: #{tpu_custom_call.1} parent=1 // pred_region
      %vm19 = vcmask 0
      %20 = vst.msk [vmem:[#allocation2] sm:$0x1] %vm19, 0.0
    $region17: #{tpu_custom_call.1} parent=1 // pred_fallthru
      _
    %v21 = vld [vmem:[%s0] sm:$0x3]
    %v22 = vld [vmem:[%s1] sm:$0x1]
    %v23 = vlaneseq
    %v24 = vand.u32 %v23, 127
    %s25 = smul.u32 0, 8
    %v26 = vstv %s25
    %v27 = vadd.s32 %v26, %v24
    %vm28 = vcmp.lt.s32.totalorder %v27, 8
    %v29 = vlaneseq
    %v30 = vshrl.u32 %v29, 7
    %v31 = vlaneseq
    %v32 = vshrl.u32 %v31, 7
    %v33 = vsub.s32 0, %v32
    %v34 = vrot.slane %v22, %v33
    %vm35 = vcmp.eq.s32.totalorder %v30, %v34
    %v36 = vsel %vm35, %v21, 0.0
    %vm37 = vcmask 58368
    %v38 = vsel %vm37, %v36, 0.0
    %v39 = vrot.slane %v38, 4
    %v40 = vadd.f32 %v38, %v39
    %v41 = vrot.slane %v40, 2
    %v42 = vadd.f32 %v40, %v41
    %v43 = vrot.slane %v42, 1
    %v44 = vadd.f32 %v42, %v43
    %v45 = vsel %vm28, %v44, 1.0
    %v46 = vlog2.pop %v45
    %v47 = vmul.f32 %v46, 0.6931472
    %v48 = vld [vmem:[%s2] sm:$0x3]
    %50 = vset.pattern.permute.xlu0 0
    %51 = vperm.xlu0 %50, %v48
    %v52 = vpop.permute.xlu0 %51
    %v54 = vsel %vm35, %v52, 0.0
    %v55 = vsel %vm37, %v54, 0.0
    %v56 = vrot.slane %v55, 4
    %v57 = vadd.f32 %v55, %v56
    %v58 = vrot.slane %v57, 2
    %v59 = vadd.f32 %v57, %v58
    %v60 = vrot.slane %v59, 1
    %v61 = vadd.f32 %v59, %v60
    %v62 = vmul.f32 %v47, %v61
    %v63 = vsub.f32 1.0, %v45
    %v64 = vmul.f32 %v63, %v63
    %v65 = vsub.f32 0.0, %v64
    %v66 = vmul.f32 %v65, %v62
    %v67 = vsel %vm28, %v66, 0.0
    %v68 = vld [vmem:[#allocation2] sm:$0x1]
    %vm69 = vcmask 64512
    %v70 = vsel %vm69, %v67, 0.0
    %71 = vadd.xlane.f32.xlu0 %v70
    %v72 = vpop.xlane.xlu0 %71
    %v73 = vadd.f32 %v68, %v72
    %vm74 = vcmask 0
    %75 = vst.msk [vmem:[#allocation2] sm:$0x1] %vm74, %v73
    // Predicated region
    $region18: #{tpu_custom_call.1} parent=1 // pred_check
      %p76 = pneg %p15
    $region19: #{tpu_custom_call.1} parent=1 // pred_check_branch
      %78 = sbr.rel (%p76) target = $region21
    $region20: #{tpu_custom_call.1} parent=1 // pred_region
      %v79 = vld [vmem:[#allocation2] sm:$0x1]
      %v80 = vrcp.pop 8.0
      %v81 = vmul.f32 %v79, %v80
      %82 = vst.msk [vmem:[#allocation3] sm:$0x1] %vm74, %v81
    $region21: #{tpu_custom_call.1} parent=1 // pred_fallthru
      _
    // Predicated region
    $region22: #{tpu_custom_call.1} parent=1 // pred_check
      _
    $region23: #{tpu_custom_call.1} parent=1 // pred_check_branch
      %84 = sbr.rel (0) target = $region25
    $region24: #{tpu_custom_call.1} parent=1 // pred_region
      %s86 = ssub.s32 16, 16
      %87 = vsyncadd [#allocation4], %s86
      %s89 = sshll.u32 [#allocation3], 4
      %s90 = int_to_ptr.vmem [resolvable:$true] %s89
      %92 = dma.vmem_to_hbm [thread:$0]  %s90, 16, %s3, [#allocation4]
    $region25: #{tpu_custom_call.1} parent=1 // pred_fallthru
      _
    // Predicated region
    $region26: #{tpu_custom_call.1} parent=1 // pred_check
      _
    $region27: #{tpu_custom_call.1} parent=1 // pred_check_branch
      %94 = sbr.rel (0) target = $region29
    $region28: #{tpu_custom_call.1} parent=1 // pred_region
      %95 = dma.done [#allocation4], 16
    $region29: #{tpu_custom_call.1} parent=1 // pred_fallthru
      _
    %96 = vsyncpa [#allocation4], 1

</llo_original>
